<compile_context>
chip_gen: v5e
topology: v5e:2x2
jax: 0.10.0
libtpu: 0.0.40
codegen_flags: <defaults>
</compile_context>

<pallas_src>
import functools
import math

import jax
import jax.numpy as jnp
from jax.experimental import pallas as pl
from jax.experimental.pallas import tpu as pltpu

LANE = 128
SUBLANE = 8


def _round_up(n, m):
    return ((n + m - 1) // m) * m


def _sigmoid(z):
    # exp / div go to the EUP; explicit formula (matches the reference exactly).
    return 1.0 / (1.0 + jnp.exp(-z))


def _mlp_kernel(x_ref, *args, num_linear, last_activation):
    """args = (w_0, b_0, w_1, b_1, ..., w_{L-1}, b_{L-1}, o_ref)."""
    o_ref = args[-1]
    wb = args[:-1]

    h = x_ref[...]                       # stays in the input dtype
    for l in range(num_linear):
        w = wb[2 * l][...]
        b = wb[2 * l + 1][...]
        z = jnp.dot(h, w, preferred_element_type=jnp.float32) + b.astype(jnp.float32)
        if l < num_linear - 1 or last_activation:
            z = _sigmoid(z)
        # Feed the next matmul in the input dtype (no-op for f32 inputs).
        h = z.astype(x_ref.dtype) if l < num_linear - 1 else z
    o_ref[...] = h.astype(o_ref.dtype)


def mlp_block_forward(x, params, *, last_activation, block_n=1024):
    """Pallas forward pass for MLPBlock (batchnorm=False, activation=Sigmoid).

    x:      [N, input_dim]
    params: list of (W [in_features, out_features], b [out_features]) per
            Linear layer, in order.
    """
    N, in_dim = x.shape
    num_linear = len(params)
    out_dim = params[-1][0].shape[1]

    # ---- lane-pad every layer's output width to a multiple of 128 ----------
    padded = []
    prev_out_pad = in_dim                      # x itself is fed unpadded
    for (w, b) in params:
        f_in, f_out = w.shape
        f_out_pad = _round_up(f_out, LANE)
        w_p = jnp.zeros((prev_out_pad, f_out_pad), w.dtype).at[:f_in, :f_out].set(w)
        b_p = jnp.zeros((1, f_out_pad), b.dtype).at[0, :f_out].set(b.reshape(-1))
        padded.append((w_p, b_p))
        prev_out_pad = f_out_pad
    out_pad = prev_out_pad

    # ---- pick a batch tile that fits the smallest default scoped VMEM ------
    itemsize = x.dtype.itemsize
    widest = max(out_pad, max(wp.shape[1] for wp, _ in padded))
    # double-buffered x + out tiles plus ~2 f32-wide temporaries per row
    bytes_per_row = 2 * in_dim * itemsize + 2 * out_pad * itemsize + 2 * widest * 4
    budget = 8 * 1024 * 1024               # conservative: << 16 MiB (v5e default)
    max_rows = max(SUBLANE, (budget // bytes_per_row) // SUBLANE * SUBLANE)
    block_n = min(block_n, max_rows)
    if N <= block_n:
        block_n = N                        # single full-extent tile (always legal)
    else:
        block_n = max(SUBLANE, (block_n // SUBLANE) * SUBLANE)
    grid = (pl.cdiv(N, block_n),)          # ragged last tile handled by masking

    # ---- specs, flat args, cost estimate ------------------------------------
    kernel = functools.partial(_mlp_kernel, num_linear=num_linear,
                               last_activation=last_activation)

    in_specs = [pl.BlockSpec((block_n, in_dim), lambda i: (i, 0))]
    flat_args = [x]
    flops = 0
    transcendentals = 0
    for li, (w_p, b_p) in enumerate(padded):
        in_specs.append(pl.BlockSpec(w_p.shape, lambda i: (0, 0)))
        in_specs.append(pl.BlockSpec(b_p.shape, lambda i: (0, 0)))
        flat_args += [w_p, b_p]
        flops += 2 * N * w_p.shape[0] * w_p.shape[1]
        if li < num_linear - 1 or last_activation:
            transcendentals += N * w_p.shape[1]
    bytes_accessed = (x.size * itemsize + N * out_pad * itemsize
                      + sum(int(a.size) * a.dtype.itemsize for a in flat_args[1:]))

    out_padded = pl.pallas_call(
        kernel,
        out_shape=jax.ShapeDtypeStruct((N, out_pad), x.dtype),
        grid=grid,
        in_specs=in_specs,
        out_specs=pl.BlockSpec((block_n, out_pad), lambda i: (i, 0)),
        compiler_params=pltpu.CompilerParams(
            dimension_semantics=("parallel",)),
        cost_estimate=pl.CostEstimate(flops=flops,
                                      transcendentals=transcendentals,
                                      bytes_accessed=bytes_accessed),
    )(*flat_args)

    return out_padded[:, :out_dim]


def init_mlp_params(key, input_dim, output_dim, hidden_dim, num_layers,
                    dtype=jnp.float32):
    """PyTorch-Linear-style init: U(-1/sqrt(fan_in), 1/sqrt(fan_in))."""
    assert num_layers >= 1
    if num_layers == 1:
        dims = [(input_dim, output_dim)]
    else:
        dims = ([(input_dim, hidden_dim)]
                + [(hidden_dim, hidden_dim)] * (num_layers - 2)
                + [(hidden_dim, output_dim)])
    params = []
    for (f_in, f_out) in dims:
        key, kw, kb = jax.random.split(key, 3)
        bound = 1.0 / math.sqrt(f_in)
        w = jax.random.uniform(kw, (f_in, f_out), dtype, -bound, bound)
        b = jax.random.uniform(kb, (f_out,), dtype, -bound, bound)
        params.append((w, b))
    return params


def mlp_block_reference(x, params, *, last_activation):
    """Pure-JAX reference mirroring the PyTorch module (and kernel dtypes)."""
    L = len(params)
    h = x
    for l, (w, b) in enumerate(params):
        z = jnp.dot(h, w, preferred_element_type=jnp.float32) + b.astype(jnp.float32)
        if l < L - 1 or last_activation:
            z = _sigmoid(z)
        h = z.astype(x.dtype) if l < L - 1 else z
    return h.astype(x.dtype)


if __name__ == "__main__":
    key = jax.random.PRNGKey(0)
    kx, kp, kp1 = jax.random.split(key, 3)

    # MLPBlock(input_dim=4, output_dim=5, hidden_dim=32, num_layers=3,
    #          last_activation=True, batchnorm=False, activation=nn.Sigmoid)
    N, input_dim, output_dim, hidden_dim, num_layers = 50, 4, 5, 32, 3
    x = jax.random.normal(kx, (N, input_dim), jnp.float32)

    params = init_mlp_params(kp, input_dim, output_dim, hidden_dim, num_layers)
    out = mlp_block_forward(x, params, last_activation=True, block_n=16)
    out = jax.block_until_ready(out)                  # grid of 4, ragged last tile
    ref = mlp_block_reference(x, params, last_activation=True)
    assert out.shape == (N, output_dim) and out.dtype == x.dtype
    assert jnp.allclose(out, ref, atol=1e-4, rtol=1e-4), "3-layer mismatch vs reference"

    # num_layers == 1 path: a single Linear, no activation
    params1 = init_mlp_params(kp1, input_dim, output_dim, hidden_dim, 1)
    out1 = jax.block_until_ready(
        mlp_block_forward(x, params1, last_activation=False, block_n=16))
    ref1 = mlp_block_reference(x, params1, last_activation=False)
    assert out1.shape == (N, output_dim)
    assert jnp.allclose(out1, ref1, atol=1e-4, rtol=1e-4), "1-layer mismatch vs reference"

    print("KERNEL_OK")
</pallas_src>

<mosaic_0001>
module attributes {stable_mosaic.version = 11 : i64} {
  func.func @_mlp_kernel(%arg0: i32, %arg1: memref<16x4xf32, #tpu.memory_space<vmem>>, %arg2: memref<4x128xf32, #tpu.memory_space<vmem>>, %arg3: memref<1x128xf32, #tpu.memory_space<vmem>>, %arg4: memref<128x128xf32, #tpu.memory_space<vmem>>, %arg5: memref<1x128xf32, #tpu.memory_space<vmem>>, %arg6: memref<128x128xf32, #tpu.memory_space<vmem>>, %arg7: memref<1x128xf32, #tpu.memory_space<vmem>>, %arg8: memref<16x128xf32, #tpu.memory_space<vmem>>) attributes {dimension_semantics = [#tpu.dimension_semantics<parallel>], iteration_bounds = array<i64: 4>, scalar_prefetch = 0 : i64, scratch_operands = 0 : i64, tpu.core_type = #tpu.core_type<tc>, window_params = [{transform_indices = @transform_0, window_bounds = array<i64: 16, 4>}, {pipeline_mode = #tpu.pipeline_mode<synchronous>, transform_indices = @transform_1, window_bounds = array<i64: 4, 128>}, {pipeline_mode = #tpu.pipeline_mode<synchronous>, transform_indices = @transform_2, window_bounds = array<i64: 1, 128>}, {pipeline_mode = #tpu.pipeline_mode<synchronous>, transform_indices = @transform_3, window_bounds = array<i64: 128, 128>}, {pipeline_mode = #tpu.pipeline_mode<synchronous>, transform_indices = @transform_4, window_bounds = array<i64: 1, 128>}, {pipeline_mode = #tpu.pipeline_mode<synchronous>, transform_indices = @transform_5, window_bounds = array<i64: 128, 128>}, {pipeline_mode = #tpu.pipeline_mode<synchronous>, transform_indices = @transform_6, window_bounds = array<i64: 1, 128>}, {transform_indices = @transform_7, window_bounds = array<i64: 16, 128>}]} {
    %c0 = arith.constant 0 : index
    %c0_0 = arith.constant 0 : index
    %0 = vector.load %arg1[%c0, %c0_0] : memref<16x4xf32, #tpu.memory_space<vmem>>, vector<16x4xf32>
    %c0_1 = arith.constant 0 : index
    %c0_2 = arith.constant 0 : index
    %1 = vector.load %arg2[%c0_1, %c0_2] : memref<4x128xf32, #tpu.memory_space<vmem>>, vector<4x128xf32>
    %c0_3 = arith.constant 0 : index
    %c0_4 = arith.constant 0 : index
    %2 = vector.load %arg3[%c0_3, %c0_4] : memref<1x128xf32, #tpu.memory_space<vmem>>, vector<1x128xf32>
    %cst = arith.constant dense<0.000000e+00> : vector<16x128xf32>
    %3 = tpu.matmul %0, %1, %cst {dimension_numbers = #tpu.dot_dimension_numbers<[1], [0], [0], [1], [0, 0, 1, 1], [], []>} : vector<16x4xf32>, vector<4x128xf32>, vector<16x128xf32> -> vector<16x128xf32>
    %4 = vector.broadcast %2 : vector<1x128xf32> to vector<16x128xf32>
    %5 = arith.addf %3, %4 : vector<16x128xf32>
    %cst_5 = arith.constant 0.000000e+00 : f32
    %6 = vector.broadcast %cst_5 : f32 to vector<16x128xf32>
    %7 = arith.subf %6, %5 : vector<16x128xf32>
    %8 = math.exp %7 : vector<16x128xf32>
    %cst_6 = arith.constant 1.000000e+00 : f32
    %9 = vector.broadcast %cst_6 : f32 to vector<16x128xf32>
    %10 = arith.addf %9, %8 : vector<16x128xf32>
    %cst_7 = arith.constant 1.000000e+00 : f32
    %11 = vector.broadcast %cst_7 : f32 to vector<16x128xf32>
    %12 = arith.divf %11, %10 : vector<16x128xf32>
    %c0_8 = arith.constant 0 : index
    %c0_9 = arith.constant 0 : index
    %13 = vector.load %arg4[%c0_8, %c0_9] : memref<128x128xf32, #tpu.memory_space<vmem>>, vector<128x128xf32>
    %c0_10 = arith.constant 0 : index
    %c0_11 = arith.constant 0 : index
    %14 = vector.load %arg5[%c0_10, %c0_11] : memref<1x128xf32, #tpu.memory_space<vmem>>, vector<1x128xf32>
    %cst_12 = arith.constant dense<0.000000e+00> : vector<16x128xf32>
    %15 = tpu.matmul %12, %13, %cst_12 {dimension_numbers = #tpu.dot_dimension_numbers<[1], [0], [0], [1], [0, 0, 1, 1], [], []>} : vector<16x128xf32>, vector<128x128xf32>, vector<16x128xf32> -> vector<16x128xf32>
    %16 = vector.broadcast %14 : vector<1x128xf32> to vector<16x128xf32>
    %17 = arith.addf %15, %16 : vector<16x128xf32>
    %cst_13 = arith.constant 0.000000e+00 : f32
    %18 = vector.broadcast %cst_13 : f32 to vector<16x128xf32>
    %19 = arith.subf %18, %17 : vector<16x128xf32>
    %20 = math.exp %19 : vector<16x128xf32>
    %cst_14 = arith.constant 1.000000e+00 : f32
    %21 = vector.broadcast %cst_14 : f32 to vector<16x128xf32>
    %22 = arith.addf %21, %20 : vector<16x128xf32>
    %cst_15 = arith.constant 1.000000e+00 : f32
    %23 = vector.broadcast %cst_15 : f32 to vector<16x128xf32>
    %24 = arith.divf %23, %22 : vector<16x128xf32>
    %c0_16 = arith.constant 0 : index
    %c0_17 = arith.constant 0 : index
    %25 = vector.load %arg6[%c0_16, %c0_17] : memref<128x128xf32, #tpu.memory_space<vmem>>, vector<128x128xf32>
    %c0_18 = arith.constant 0 : index
    %c0_19 = arith.constant 0 : index
    %26 = vector.load %arg7[%c0_18, %c0_19] : memref<1x128xf32, #tpu.memory_space<vmem>>, vector<1x128xf32>
    %cst_20 = arith.constant dense<0.000000e+00> : vector<16x128xf32>
    %27 = tpu.matmul %24, %25, %cst_20 {dimension_numbers = #tpu.dot_dimension_numbers<[1], [0], [0], [1], [0, 0, 1, 1], [], []>} : vector<16x128xf32>, vector<128x128xf32>, vector<16x128xf32> -> vector<16x128xf32>
    %28 = vector.broadcast %26 : vector<1x128xf32> to vector<16x128xf32>
    %29 = arith.addf %27, %28 : vector<16x128xf32>
    %cst_21 = arith.constant 0.000000e+00 : f32
    %30 = vector.broadcast %cst_21 : f32 to vector<16x128xf32>
    %31 = arith.subf %30, %29 : vector<16x128xf32>
    %32 = math.exp %31 : vector<16x128xf32>
    %cst_22 = arith.constant 1.000000e+00 : f32
    %33 = vector.broadcast %cst_22 : f32 to vector<16x128xf32>
    %34 = arith.addf %33, %32 : vector<16x128xf32>
    %cst_23 = arith.constant 1.000000e+00 : f32
    %35 = vector.broadcast %cst_23 : f32 to vector<16x128xf32>
    %36 = arith.divf %35, %34 : vector<16x128xf32>
    %c0_24 = arith.constant 0 : index
    %c0_25 = arith.constant 0 : index
    %37 = vector.load %arg8[%c0_24, %c0_25] : memref<16x128xf32, #tpu.memory_space<vmem>>, vector<16x128xf32>
    tpu.vector_store %arg8[%c0_24, %c0_25], %36 {strides = array<i32>} : memref<16x128xf32, #tpu.memory_space<vmem>>, vector<16x128xf32>,
    return
  }
  func.func @transform_0(%arg0: i32) -> (i32, i32) {
    %c0_i32 = arith.constant 0 : i32
    %c0_i32_0 = arith.constant 0 : i32
    return %arg0, %c0_i32 : i32, i32
  }
  func.func @transform_1(%arg0: i32) -> (i32, i32) {
    %c0_i32 = arith.constant 0 : i32
    %c0_i32_0 = arith.constant 0 : i32
    %c0_i32_1 = arith.constant 0 : i32
    return %c0_i32, %c0_i32_0 : i32, i32
  }
  func.func @transform_2(%arg0: i32) -> (i32, i32) {
    %c0_i32 = arith.constant 0 : i32
    %c0_i32_0 = arith.constant 0 : i32
    %c0_i32_1 = arith.constant 0 : i32
    return %c0_i32, %c0_i32_0 : i32, i32
  }
  func.func @transform_3(%arg0: i32) -> (i32, i32) {
    %c0_i32 = arith.constant 0 : i32
    %c0_i32_0 = arith.constant 0 : i32
    %c0_i32_1 = arith.constant 0 : i32
    return %c0_i32, %c0_i32_0 : i32, i32
  }
  func.func @transform_4(%arg0: i32) -> (i32, i32) {
    %c0_i32 = arith.constant 0 : i32
    %c0_i32_0 = arith.constant 0 : i32
    %c0_i32_1 = arith.constant 0 : i32
    return %c0_i32, %c0_i32_0 : i32, i32
  }
  func.func @transform_5(%arg0: i32) -> (i32, i32) {
    %c0_i32 = arith.constant 0 : i32
    %c0_i32_0 = arith.constant 0 : i32
    %c0_i32_1 = arith.constant 0 : i32
    return %c0_i32, %c0_i32_0 : i32, i32
  }
  func.func @transform_6(%arg0: i32) -> (i32, i32) {
    %c0_i32 = arith.constant 0 : i32
    %c0_i32_0 = arith.constant 0 : i32
    %c0_i32_1 = arith.constant 0 : i32
    return %c0_i32, %c0_i32_0 : i32, i32
  }
  func.func @transform_7(%arg0: i32) -> (i32, i32) {
    %c0_i32 = arith.constant 0 : i32
    %c0_i32_0 = arith.constant 0 : i32
    return %arg0, %c0_i32 : i32, i32
  }
}

</mosaic_0001>

<llo_original>
// kernel: tpu_custom_call.1
$region0: #{tpu_custom_call.1}
  #allocation0 [shape = 'u32[]', space=smem, size = 0x4, offset = 0x4, fixed_abs, tag = 'smem constant byte address 0x4 - core index']
  #allocation1 [shape = 'u32[72,128]{1,0:T(1,128)}', space=vmem, size = 0x9000, scoped, tag = 'internal scratch']
  %s0 = inlined_call_operand.vmem [shape: f32[50,4], index: 0, kind: input, shape index: {}]
  %s1 = inlined_call_operand.vmem [shape: f32[4,128], index: 1, kind: input, shape index: {}]
  %s2 = inlined_call_operand.vmem [shape: f32[1,128], index: 2, kind: input, shape index: {}]
  %s3 = inlined_call_operand.hbm [shape: f32[128,128], index: 3, kind: input, shape index: {}]
  %s4 = inlined_call_operand.vmem [shape: f32[1,128], index: 4, kind: input, shape index: {}]
  %s5 = inlined_call_operand.hbm [shape: f32[128,128], index: 5, kind: input, shape index: {}]
  %s6 = inlined_call_operand.vmem [shape: f32[1,128], index: 6, kind: input, shape index: {}]
  %s7 = inlined_call_operand.hbm [shape: f32[50,128], index: 7, kind: output, shape index: {}]
  %s8 = sld [smem:[#allocation0]]
  $region69: #{tpu_custom_call.1} parent=0
    _
  %s10 = ssub.s32 1, %s8
  %s11 = scalar_select 0, %s10, %s8
  $region1: #{tpu_custom_call.1} parent=0
    #allocation2 [shape = 'u8[65536]{0}', space=vmem, size = 0x10000, scoped, tag = 'input window, operand 3, single buffered']
    #allocation3 [shape = 's32[2]{0}', space=sflag, size = 0x8, scoped, tag = 'scoped memory for tpu_custom_call.1']
    #allocation4 [shape = 's32[2]{0}', space=sflag, size = 0x8, scoped, tag = 'scoped memory for tpu_custom_call.1']
    #allocation5 [shape = 'u8[65536]{0}', space=vmem, size = 0x10000, scoped, tag = 'input window, operand 5, single buffered']
    #allocation6 [shape = 's32[1]{0}', space=sflag, size = 0x4, scoped, tag = 'scoped memory for tpu_custom_call.1']
    #allocation7 [shape = 'u8[16384]{0}', space=vmem, size = 0x4000, scoped, tag = 'output window, operand 0']
    %12 = vsyncpa [#allocation3], 0
    %13 = vsyncpa [#allocation6], 0
    %14 = vsyncpa [#allocation4], 0
    %s15 = scalar_lea.sflag [#allocation4], 1
    %16 = vsyncpa %s15, 0
    loop: start=0, step=1, limit=6
    $region2: #{tpu_custom_call.1} parent=1 // loop_pre_header
      _
    $region3: #{tpu_custom_call.1} parent=1 // loop_header
      %s18 = sphi 0, %s22
      %p19 = scmp.ge.s32.totalorder %s18, 6
      %s28 = sphi 0, %s30
      %s31 = sphi 0, %s28
      %s32 = sphi 0, %s31
      %s48 = sphi 0, %s32
      %s52 = sphi 0, %s52
      %s54 = sphi 0, %s52
      %s55 = sphi 0, %s54
      %s69 = sphi 0, %s55
      %s73 = sphi 0, %s73
      %s75 = sphi 0, %s73
      %s76 = sphi 0, %s75
      %s90 = sphi 0, %s76
      %s94 = sphi 0, %s94
      %s96 = sphi 0, %s94
      %s97 = sphi 0, %s96
      %s111 = sphi 0, %s97
      %s115 = sphi 0, %s115
      %s117 = sphi 0, %s115
      %s118 = sphi 0, %s117
      %s132 = sphi 0, %s118
      %s136 = sphi 0, %s136
      %s138 = sphi 0, %s136
      %s139 = sphi 0, %s138
      %s153 = sphi 0, %s139
      %s157 = sphi 0, %s157
      %s159 = sphi 0, %s157
      %s160 = sphi 0, %s159
      %s174 = sphi 0, %s160
      %s180 = sphi 0, %s182
      %s183 = sphi 0, %s180
      %s184 = sphi 0, %s183
      %s200 = sphi 0, %s184
    $region4: #{tpu_custom_call.1} parent=1 // loop_header_branch
      %21 = sbr.rel (%p19) target = $region8
    $region5: #{tpu_custom_call.1} parent=1 // loop_body
      %s23 = ssub.s32 %s18, 1
      %s24 = ssub.s32 %s18, 2
      %s25 = sadd.s32 %s18, 1
      %s26 = ssub.s32 %s18, %s25
      %p27 = scmp.eq.s32.totalorder %s26, 0
      %s29 = sadd.s32 %s28, 1
      %s30 = scalar_select %p27, %s28, %s29
      %p33 = pneg %p27
      %p34 = scmp.eq.s32.totalorder %s18, 3
      %p35 = por %p33, %p34
      %p36 = scmp.ne.s32.totalorder %s28, %s31
      %p37 = scmp.eq.s32.totalorder %s18, 0
      %p38 = por %p36, %p37
      %p39 = scmp.ne.s32.totalorder %s28, %s31
      %p40 = scmp.eq.s32.totalorder %s23, 3
      %p41 = por %p39, %p40
      %p42 = scmp.ne.s32.totalorder %s31, %s32
      %p43 = scmp.eq.s32.totalorder %s23, 0
      %p44 = por %p42, %p43
      %p45 = scmp.ne.s32.totalorder %s31, %s32
      %p46 = scmp.eq.s32.totalorder %s24, 3
      %p47 = por %p45, %p46
      %p49 = scmp.ne.s32.totalorder %s32, %s48
      %p50 = scmp.eq.s32.totalorder %s24, 0
      %p51 = por %p49, %p50
      %s53 = sadd.s32 %s52, 1
      %p56 = scmp.eq.s32.totalorder %s18, 3
      %p57 = scmp.ne.s32.totalorder %s52, %s54
      %p58 = scmp.eq.s32.totalorder %s18, 0
      %p59 = por %p57, %p58
      %p60 = scmp.ne.s32.totalorder %s52, %s54
      %p61 = scmp.eq.s32.totalorder %s23, 3
      %p62 = por %p60, %p61
      %p63 = scmp.ne.s32.totalorder %s54, %s55
      %p64 = scmp.eq.s32.totalorder %s23, 0
      %p65 = por %p63, %p64
      %p66 = scmp.ne.s32.totalorder %s54, %s55
      %p67 = scmp.eq.s32.totalorder %s24, 3
      %p68 = por %p66, %p67
      %p70 = scmp.ne.s32.totalorder %s55, %s69
      %p71 = scmp.eq.s32.totalorder %s24, 0
      %p72 = por %p70, %p71
      %s74 = sadd.s32 %s73, 1
      %p77 = scmp.eq.s32.totalorder %s18, 3
      %p78 = scmp.ne.s32.totalorder %s73, %s75
      %p79 = scmp.eq.s32.totalorder %s18, 0
      %p80 = por %p78, %p79
      %p81 = scmp.ne.s32.totalorder %s73, %s75
      %p82 = scmp.eq.s32.totalorder %s23, 3
      %p83 = por %p81, %p82
      %p84 = scmp.ne.s32.totalorder %s75, %s76
      %p85 = scmp.eq.s32.totalorder %s23, 0
      %p86 = por %p84, %p85
      %p87 = scmp.ne.s32.totalorder %s75, %s76
      %p88 = scmp.eq.s32.totalorder %s24, 3
      %p89 = por %p87, %p88
      %p91 = scmp.ne.s32.totalorder %s76, %s90
      %p92 = scmp.eq.s32.totalorder %s24, 0
      %p93 = por %p91, %p92
      %s95 = sadd.s32 %s94, 1
      %p98 = scmp.eq.s32.totalorder %s18, 3
      %p99 = scmp.ne.s32.totalorder %s94, %s96
      %p100 = scmp.eq.s32.totalorder %s18, 0
      %p101 = por %p99, %p100
      %p102 = scmp.ne.s32.totalorder %s94, %s96
      %p103 = scmp.eq.s32.totalorder %s23, 3
      %p104 = por %p102, %p103
      %p105 = scmp.ne.s32.totalorder %s96, %s97
      %p106 = scmp.eq.s32.totalorder %s23, 0
      %p107 = por %p105, %p106
      %p108 = scmp.ne.s32.totalorder %s96, %s97
      %p109 = scmp.eq.s32.totalorder %s24, 3
      %p110 = por %p108, %p109
      %p112 = scmp.ne.s32.totalorder %s97, %s111
      %p113 = scmp.eq.s32.totalorder %s24, 0
      %p114 = por %p112, %p113
      %s116 = sadd.s32 %s115, 1
      %p119 = scmp.eq.s32.totalorder %s18, 3
      %p120 = scmp.ne.s32.totalorder %s115, %s117
      %p121 = scmp.eq.s32.totalorder %s18, 0
      %p122 = por %p120, %p121
      %p123 = scmp.ne.s32.totalorder %s115, %s117
      %p124 = scmp.eq.s32.totalorder %s23, 3
      %p125 = por %p123, %p124
      %p126 = scmp.ne.s32.totalorder %s117, %s118
      %p127 = scmp.eq.s32.totalorder %s23, 0
      %p128 = por %p126, %p127
      %p129 = scmp.ne.s32.totalorder %s117, %s118
      %p130 = scmp.eq.s32.totalorder %s24, 3
      %p131 = por %p129, %p130
      %p133 = scmp.ne.s32.totalorder %s118, %s132
      %p134 = scmp.eq.s32.totalorder %s24, 0
      %p135 = por %p133, %p134
      %s137 = sadd.s32 %s136, 1
      %p140 = scmp.eq.s32.totalorder %s18, 3
      %p141 = scmp.ne.s32.totalorder %s136, %s138
      %p142 = scmp.eq.s32.totalorder %s18, 0
      %p143 = por %p141, %p142
      %p144 = scmp.ne.s32.totalorder %s136, %s138
      %p145 = scmp.eq.s32.totalorder %s23, 3
      %p146 = por %p144, %p145
      %p147 = scmp.ne.s32.totalorder %s138, %s139
      %p148 = scmp.eq.s32.totalorder %s23, 0
      %p149 = por %p147, %p148
      %p150 = scmp.ne.s32.totalorder %s138, %s139
      %p151 = scmp.eq.s32.totalorder %s24, 3
      %p152 = por %p150, %p151
      %p154 = scmp.ne.s32.totalorder %s139, %s153
      %p155 = scmp.eq.s32.totalorder %s24, 0
      %p156 = por %p154, %p155
      %s158 = sadd.s32 %s157, 1
      %p161 = scmp.eq.s32.totalorder %s18, 3
      %p162 = scmp.ne.s32.totalorder %s157, %s159
      %p163 = scmp.eq.s32.totalorder %s18, 0
      %p164 = por %p162, %p163
      %p165 = scmp.ne.s32.totalorder %s157, %s159
      %p166 = scmp.eq.s32.totalorder %s23, 3
      %p167 = por %p165, %p166
      %p168 = scmp.ne.s32.totalorder %s159, %s160
      %p169 = scmp.eq.s32.totalorder %s23, 0
      %p170 = por %p168, %p169
      %p171 = scmp.ne.s32.totalorder %s159, %s160
      %p172 = scmp.eq.s32.totalorder %s24, 3
      %p173 = por %p171, %p172
      %p175 = scmp.ne.s32.totalorder %s160, %s174
      %p176 = scmp.eq.s32.totalorder %s24, 0
      %p177 = por %p175, %p176
      %s178 = ssub.s32 %s18, %s25
      %p179 = scmp.eq.s32.totalorder %s178, 0
      %s181 = sadd.s32 %s180, 1
      %s182 = scalar_select %p179, %s180, %s181
      %p185 = pneg %p179
      %p186 = scmp.eq.s32.totalorder %s18, 3
      %p187 = por %p185, %p186
      %p188 = scmp.ne.s32.totalorder %s180, %s183
      %p189 = scmp.eq.s32.totalorder %s18, 0
      %p190 = por %p188, %p189
      %p191 = scmp.ne.s32.totalorder %s180, %s183
      %p192 = scmp.eq.s32.totalorder %s23, 3
      %p193 = por %p191, %p192
      %p194 = scmp.ne.s32.totalorder %s183, %s184
      %p195 = scmp.eq.s32.totalorder %s23, 0
      %p196 = por %p194, %p195
      %p197 = scmp.ne.s32.totalorder %s183, %s184
      %p198 = scmp.eq.s32.totalorder %s24, 3
      %p199 = por %p197, %p198
      %p201 = scmp.ne.s32.totalorder %s184, %s200
      %p202 = scmp.eq.s32.totalorder %s24, 0
      %p203 = por %p201, %p202
      %p204 = scmp.le.s32.totalorder 1, %s18
      %p205 = scmp.lt.s32.totalorder %s18, 5
      %p206 = pnand %p204, %p205
      %p207 = pneg %p206
      // Predicated region
      $region9: #{tpu_custom_call.1} parent=5 // pred_check
        _
      $region10: #{tpu_custom_call.1} parent=5 // pred_check_branch
        %209 = sbr.rel (%p206) target = $region12
      $region11: #{tpu_custom_call.1} parent=5 // pred_region
        %s210 = ssub.s32 %s18, 1
        // Predicated region
        $region13: #{tpu_custom_call.1} parent=11 // pred_check
          %p211 = pneg %p65
        $region14: #{tpu_custom_call.1} parent=11 // pred_check_branch
          %213 = sbr.rel (%p211) target = $region16
        $region15: #{tpu_custom_call.1} parent=11 // pred_region
          _
        $region16: #{tpu_custom_call.1} parent=11 // pred_fallthru
          _
        // Predicated region
        $region17: #{tpu_custom_call.1} parent=11 // pred_check
          %p214 = pneg %p86
        $region18: #{tpu_custom_call.1} parent=11 // pred_check_branch
          %216 = sbr.rel (%p214) target = $region20
        $region19: #{tpu_custom_call.1} parent=11 // pred_region
          _
        $region20: #{tpu_custom_call.1} parent=11 // pred_fallthru
          _
        // Predicated region
        $region21: #{tpu_custom_call.1} parent=11 // pred_check
          %p217 = pneg %p107
        $region22: #{tpu_custom_call.1} parent=11 // pred_check_branch
          %219 = sbr.rel (%p217) target = $region24
        $region23: #{tpu_custom_call.1} parent=11 // pred_region
          %221 = vsyncadd [#allocation3], 0
          %s222 = sshll.u32 %s3, 4
          %s223 = int_to_ptr.hbm [resolvable:$true] %s222
          %s224 = sshll.u32 [#allocation2], 4
          %s225 = int_to_ptr.vmem [resolvable:$true] %s224
          %230 = dma.hbm_to_vmem [thread:$0]  %s223, 2048, %s225, [#allocation3], 128, 128, 8
        $region24: #{tpu_custom_call.1} parent=11 // pred_fallthru
          _
        // Predicated region
        $region25: #{tpu_custom_call.1} parent=11 // pred_check
          %p231 = pneg %p128
        $region26: #{tpu_custom_call.1} parent=11 // pred_check_branch
          %233 = sbr.rel (%p231) target = $region28
        $region27: #{tpu_custom_call.1} parent=11 // pred_region
          _
        $region28: #{tpu_custom_call.1} parent=11 // pred_fallthru
          _
        // Predicated region
        $region29: #{tpu_custom_call.1} parent=11 // pred_check
          %p234 = pneg %p149
        $region30: #{tpu_custom_call.1} parent=11 // pred_check_branch
          %236 = sbr.rel (%p234) target = $region32
        $region31: #{tpu_custom_call.1} parent=11 // pred_region
          %238 = vsyncadd [#allocation6], 0
          %s239 = sshll.u32 %s5, 4
          %s240 = int_to_ptr.hbm [resolvable:$true] %s239
          %s241 = sshll.u32 [#allocation5], 4
          %s242 = int_to_ptr.vmem [resolvable:$true] %s241
          %247 = dma.hbm_to_vmem [thread:$0]  %s240, 2048, %s242, [#allocation6], 128, 128, 8
        $region32: #{tpu_custom_call.1} parent=11 // pred_fallthru
          _
        // Predicated region
        $region33: #{tpu_custom_call.1} parent=11 // pred_check
          %p248 = pneg %p170
        $region34: #{tpu_custom_call.1} parent=11 // pred_check_branch
          %250 = sbr.rel (%p248) target = $region36
        $region35: #{tpu_custom_call.1} parent=11 // pred_region
          _
        $region36: #{tpu_custom_call.1} parent=11 // pred_fallthru
          _
      $region12: #{tpu_custom_call.1} parent=5 // pred_fallthru
        _
      %p251 = scmp.lt.s32.totalorder %s18, 4
      // Predicated region
      $region37: #{tpu_custom_call.1} parent=5 // pred_check
        %p252 = pneg %p251
      $region38: #{tpu_custom_call.1} parent=5 // pred_check_branch
        %254 = sbr.rel (%p252) target = $region40
      $region39: #{tpu_custom_call.1} parent=5 // pred_region
        // Predicated region
        $region41: #{tpu_custom_call.1} parent=39 // pred_check
          %p255 = pneg %p38
        $region42: #{tpu_custom_call.1} parent=39 // pred_check_branch
          %257 = sbr.rel (%p255) target = $region44
        $region43: #{tpu_custom_call.1} parent=39 // pred_region
          %s258 = smul.u32 2, %s18
          %s259 = ssub.s32 7, %s258
          %p260 = scmp.lt.s32.totalorder %s259, 2
          %s261 = scalar_select %p260, %s259, 2
          %s262 = smul.u32 8, %s261
          %p263 = scmp.lt.s32.totalorder %s258, 6
          %s264 = scalar_select %p263, %s258, 6
          %s265 = smul.addr %s264, 8
          %s266 = scalar_lea.vmem %s0, %s265
          %s267 = smul.u32 2, %s18
          %s268 = ssub.s32 7, %s267
          %p269 = scmp.lt.s32.totalorder %s268, 2
          %s270 = scalar_select %p269, %s268, 2
          %s271 = smul.u32 8, %s270
        $region44: #{tpu_custom_call.1} parent=39 // pred_fallthru
          _
      $region40: #{tpu_custom_call.1} parent=5 // pred_fallthru
        _
      %p272 = scmp.le.s32.totalorder 1, %s18
      %p273 = scmp.lt.s32.totalorder %s18, 5
      %p274 = pnand %p272, %p273
      %p275 = pneg %p274
      // Predicated region
      $region45: #{tpu_custom_call.1} parent=5 // pred_check
        _
      $region46: #{tpu_custom_call.1} parent=5 // pred_check_branch
        %277 = sbr.rel (%p274) target = $region48
      $region47: #{tpu_custom_call.1} parent=5 // pred_region
        %s278 = ssub.s32 %s18, 1
        // Predicated region
        $region49: #{tpu_custom_call.1} parent=47 // pred_check
          %p279 = pneg %p107
        $region50: #{tpu_custom_call.1} parent=47 // pred_check_branch
          %281 = sbr.rel (%p279) target = $region52
        $region51: #{tpu_custom_call.1} parent=47 // pred_region
          %283 = dma.done [#allocation3], 2048
        $region52: #{tpu_custom_call.1} parent=47 // pred_fallthru
          _
        // Predicated region
        $region53: #{tpu_custom_call.1} parent=47 // pred_check
          %p284 = pneg %p149
        $region54: #{tpu_custom_call.1} parent=47 // pred_check_branch
          %286 = sbr.rel (%p284) target = $region56
        $region55: #{tpu_custom_call.1} parent=47 // pred_region
          %288 = dma.done [#allocation6], 2048
        $region56: #{tpu_custom_call.1} parent=47 // pred_fallthru
          _
        %s289 = smul.u32 2, %s23
        %s290 = ssub.s32 7, %s289
        %p291 = scmp.lt.s32.totalorder %s290, 2
        %s292 = scalar_select %p291, %s290, 2
        %s293 = smul.u32 8, %s292
        %p294 = scmp.lt.s32.totalorder %s289, 6
        %s295 = scalar_select %p294, %s289, 6
        %s296 = smul.addr %s295, 8
        %s297 = scalar_lea.vmem %s0, %s296
        %p298 = pneg %p44
        %p299 = pneg %p41
        %p300 = pneg %p65
        %p301 = pneg %p62
        %p302 = pneg %p86
        %p303 = pneg %p83
        %p304 = pneg %p107
        %p305 = pneg %p104
        %p306 = pneg %p128
        %p307 = pneg %p125
        %p308 = pneg %p149
        %p309 = pneg %p146
        %p310 = pneg %p170
        %p311 = pneg %p167
        %p312 = pneg %p196
        %p313 = pneg %p193
        %s314 = sand.u32 %s183, 1
        %s315 = scalar_lea.sflag [#allocation4], %s314
        %s316 = sand.u32 %s183, 1
        %s317 = smul.addr %s316, 16
        %s318 = scalar_lea.vmem [#allocation7], %s317
        %s319 = smul.u32 2, %s23
        %s320 = ssub.s32 7, %s319
        %p321 = scmp.lt.s32.totalorder %s320, 2
        %s322 = scalar_select %p321, %s320, 2
        %s323 = smul.u32 8, %s322
        %p324 = scmp.lt.s32.totalorder %s319, 6
        %s325 = scalar_select %p324, %s319, 6
        %s326 = smul.addr %s325, 8
        %s327 = scalar_lea.vmem %s0, %s326
        %s328 = smul.u32 2, %s23
        %s329 = ssub.s32 7, %s328
        %p330 = scmp.lt.s32.totalorder %s329, 2
        %s331 = scalar_select %p330, %s329, 2
        %s332 = smul.u32 8, %s331
        %s333 = smul.u32 2, %s23
        %s334 = ssub.s32 7, %s333
        %p335 = scmp.lt.s32.totalorder %s334, 2
        %s336 = scalar_select %p335, %s334, 2
        %s337 = smul.u32 8, %s336
        %v338 = vld [vmem:[%s327] sm:$0xff]
        %v339 = vld [vmem:[%s327 + $0x8] sm:$0xff]
        %v340 = vld [vmem:[%s1] sm:$0xf]
        %v341 = vld [vmem:[%s2] sm:$0x1]
        %v343 = vperm.slane %v341, 0
        %vm345 = vcmask 31744
        %v347 = vsel %vm345, %v338, 0
        %v350 = vsel %vm345, %v339, 0
        %vm352 = vcmask 1043456
        %v354 = vsel %vm352, %v340, 0
        %356 = vmatpush.msra.mxu0 0.0
        %357 = vmatpush.msra.mxu0 0.0
        %358 = vmatpush.msra.mxu0 0.0
        %359 = vmatpush.msra.mxu0 0.0
        %360 = vmatpush.msra.mxu0 0.0
        %361 = vmatpush.msra.mxu0 0.0
        %362 = vmatpush.msra.mxu0 0.0
        %363 = vmatpush.msra.mxu0 0.0
        %364 = vmatpush.msra.mxu0 0.0
        %365 = vmatpush.msra.mxu0 0.0
        %366 = vmatpush.msra.mxu0 0.0
        %367 = vmatpush.msra.mxu0 0.0
        %368 = vmatpush.msra.mxu0 0.0
        %369 = vmatpush.msra.mxu0 0.0
        %370 = vmatpush.msra.mxu0 0.0
        %371 = vmatpush.msra.mxu0 %v354
        %372 = vmatmul.f32.gmra.mxu0 %v347
        %v373 = vpop.f32.mrf.mxu0
        %v374 = vadd.f32 %v343, %v373
        %375 = vmatmul.f32.gmra.mxu0 %v350
        %v376 = vpop.f32.mrf.mxu0
        %v377 = vadd.f32 %v343, %v376
        %378 = vdwg.mxu0
        %v379 = vsub.f32 0.0, %v374
        %v380 = vsub.f32 0.0, %v377
        %v381 = vmul.f32 %v379, 1.442695
        %v382 = vpow.pop %v381
        %v383 = vmul.f32 %v380, 1.442695
        %v384 = vpow.pop %v383
        %v385 = vadd.f32 %v382, 1.0
        %v386 = vadd.f32 %v384, 1.0
        %v387 = vrcp.pop %v385
        %v388 = vmul.f32 %v385, %v387
        %v389 = vsub.f32 1.0, %v388
        %v390 = vmul.f32 %v387, %v389
        %v391 = vadd.f32 %v387, %v390
        %vm392 = vweird.f32 %v385
        %vm393 = vweird.f32 %v387
        %vm394 = vmor %vm392, %vm393
        %v395 = vsel %vm394, %v387, %v391
        %v396 = vand.u32 2147483647, %v385
        %vm397 = vcmp.eq.f32.partialorder %v396, 8.507059e+37
        %v398 = vand.u32 %v385, 2147483648
        %v399 = vor.u32 1.1754944e-38, %v398
        %v400 = vsel %vm397, %v399, %v395
        %v401 = vmul.f32 1.0, %v400
        %v402 = vrcp.pop %v386
        %v403 = vmul.f32 %v386, %v402
        %v404 = vsub.f32 1.0, %v403
        %v405 = vmul.f32 %v402, %v404
        %v406 = vadd.f32 %v402, %v405
        %vm407 = vweird.f32 %v386
        %vm408 = vweird.f32 %v402
        %vm409 = vmor %vm407, %vm408
        %v410 = vsel %vm409, %v402, %v406
        %v411 = vand.u32 2147483647, %v386
        %vm412 = vcmp.eq.f32.partialorder %v411, 8.507059e+37
        %v413 = vand.u32 %v386, 2147483648
        %v414 = vor.u32 1.1754944e-38, %v413
        %v415 = vsel %vm412, %v414, %v410
        %v416 = vmul.f32 1.0, %v415
        %v417 = vld [vmem:[#allocation2] sm:$0xff]
        %v418 = vld [vmem:[#allocation2 + $0x8] sm:$0xff]
        %v419 = vld [vmem:[#allocation2 + $0x10] sm:$0xff]
        %v420 = vld [vmem:[#allocation2 + $0x18] sm:$0xff]
        %v421 = vld [vmem:[#allocation2 + $0x20] sm:$0xff]
        %v422 = vld [vmem:[#allocation2 + $0x28] sm:$0xff]
        %v423 = vld [vmem:[#allocation2 + $0x30] sm:$0xff]
        %v424 = vld [vmem:[#allocation2 + $0x38] sm:$0xff]
        %v425 = vld [vmem:[#allocation2 + $0x40] sm:$0xff]
        %v426 = vld [vmem:[#allocation2 + $0x48] sm:$0xff]
        %v427 = vld [vmem:[#allocation2 + $0x50] sm:$0xff]
        %v428 = vld [vmem:[#allocation2 + $0x58] sm:$0xff]
        %v429 = vld [vmem:[#allocation2 + $0x60] sm:$0xff]
        %v430 = vld [vmem:[#allocation2 + $0x68] sm:$0xff]
        %v431 = vld [vmem:[#allocation2 + $0x70] sm:$0xff]
        %v432 = vld [vmem:[#allocation2 + $0x78] sm:$0xff]
        %v433 = vld [vmem:[%s4] sm:$0x1]
        %v435 = vperm.slane %v433, 0
        %437 = vmatpush.msra.mxu0 %v432
        %438 = vmatpush.msra.mxu0 %v431
        %439 = vmatpush.msra.mxu0 %v430
        %440 = vmatpush.msra.mxu0 %v429
        %441 = vmatpush.msra.mxu0 %v428
        %442 = vmatpush.msra.mxu0 %v427
        %443 = vmatpush.msra.mxu0 %v426
        %444 = vmatpush.msra.mxu0 %v425
        %445 = vmatpush.msra.mxu0 %v424
        %446 = vmatpush.msra.mxu0 %v423
        %447 = vmatpush.msra.mxu0 %v422
        %448 = vmatpush.msra.mxu0 %v421
        %449 = vmatpush.msra.mxu0 %v420
        %450 = vmatpush.msra.mxu0 %v419
        %451 = vmatpush.msra.mxu0 %v418
        %452 = vmatpush.msra.mxu0 %v417
        %453 = vmatmul.f32.gmra.mxu0 %v401
        %v454 = vpop.f32.mrf.mxu0
        %v455 = vadd.f32 %v435, %v454
        %456 = vmatmul.f32.gmra.mxu0 %v416
        %v457 = vpop.f32.mrf.mxu0
        %v458 = vadd.f32 %v435, %v457
        %459 = vdwg.mxu0
        %v460 = vsub.f32 0.0, %v455
        %v461 = vsub.f32 0.0, %v458
        %v462 = vmul.f32 %v460, 1.442695
        %v463 = vpow.pop %v462
        %v464 = vmul.f32 %v461, 1.442695
        %v465 = vpow.pop %v464
        %v466 = vadd.f32 %v463, 1.0
        %v467 = vadd.f32 %v465, 1.0
        %v468 = vrcp.pop %v466
        %v469 = vmul.f32 %v466, %v468
        %v470 = vsub.f32 1.0, %v469
        %v471 = vmul.f32 %v468, %v470
        %v472 = vadd.f32 %v468, %v471
        %vm473 = vweird.f32 %v466
        %vm474 = vweird.f32 %v468
        %vm475 = vmor %vm473, %vm474
        %v476 = vsel %vm475, %v468, %v472
        %v477 = vand.u32 2147483647, %v466
        %vm478 = vcmp.eq.f32.partialorder %v477, 8.507059e+37
        %v479 = vand.u32 %v466, 2147483648
        %v480 = vor.u32 1.1754944e-38, %v479
        %v481 = vsel %vm478, %v480, %v476
        %v482 = vmul.f32 1.0, %v481
        %v483 = vrcp.pop %v467
        %v484 = vmul.f32 %v467, %v483
        %v485 = vsub.f32 1.0, %v484
        %v486 = vmul.f32 %v483, %v485
        %v487 = vadd.f32 %v483, %v486
        %vm488 = vweird.f32 %v467
        %vm489 = vweird.f32 %v483
        %vm490 = vmor %vm488, %vm489
        %v491 = vsel %vm490, %v483, %v487
        %v492 = vand.u32 2147483647, %v467
        %vm493 = vcmp.eq.f32.partialorder %v492, 8.507059e+37
        %v494 = vand.u32 %v467, 2147483648
        %v495 = vor.u32 1.1754944e-38, %v494
        %v496 = vsel %vm493, %v495, %v491
        %v497 = vmul.f32 1.0, %v496
        %v498 = vld [vmem:[#allocation5] sm:$0xff]
        %v499 = vld [vmem:[#allocation5 + $0x8] sm:$0xff]
        %v500 = vld [vmem:[#allocation5 + $0x10] sm:$0xff]
        %v501 = vld [vmem:[#allocation5 + $0x18] sm:$0xff]
        %v502 = vld [vmem:[#allocation5 + $0x20] sm:$0xff]
        %v503 = vld [vmem:[#allocation5 + $0x28] sm:$0xff]
        %v504 = vld [vmem:[#allocation5 + $0x30] sm:$0xff]
        %v505 = vld [vmem:[#allocation5 + $0x38] sm:$0xff]
        %v506 = vld [vmem:[#allocation5 + $0x40] sm:$0xff]
        %v507 = vld [vmem:[#allocation5 + $0x48] sm:$0xff]
        %v508 = vld [vmem:[#allocation5 + $0x50] sm:$0xff]
        %v509 = vld [vmem:[#allocation5 + $0x58] sm:$0xff]
        %v510 = vld [vmem:[#allocation5 + $0x60] sm:$0xff]
        %v511 = vld [vmem:[#allocation5 + $0x68] sm:$0xff]
        %v512 = vld [vmem:[#allocation5 + $0x70] sm:$0xff]
        %v513 = vld [vmem:[#allocation5 + $0x78] sm:$0xff]
        %v514 = vld [vmem:[%s6] sm:$0x1]
        %v516 = vperm.slane %v514, 0
        %518 = vmatpush.msra.mxu0 %v513
        %519 = vmatpush.msra.mxu0 %v512
        %520 = vmatpush.msra.mxu0 %v511
        %521 = vmatpush.msra.mxu0 %v510
        %522 = vmatpush.msra.mxu0 %v509
        %523 = vmatpush.msra.mxu0 %v508
        %524 = vmatpush.msra.mxu0 %v507
        %525 = vmatpush.msra.mxu0 %v506
        %526 = vmatpush.msra.mxu0 %v505
        %527 = vmatpush.msra.mxu0 %v504
        %528 = vmatpush.msra.mxu0 %v503
        %529 = vmatpush.msra.mxu0 %v502
        %530 = vmatpush.msra.mxu0 %v501
        %531 = vmatpush.msra.mxu0 %v500
        %532 = vmatpush.msra.mxu0 %v499
        %533 = vmatpush.msra.mxu0 %v498
        %534 = vmatmul.f32.gmra.mxu0 %v482
        %v535 = vpop.f32.mrf.mxu0
        %v536 = vadd.f32 %v516, %v535
        %537 = vmatmul.f32.gmra.mxu0 %v497
        %v538 = vpop.f32.mrf.mxu0
        %v539 = vadd.f32 %v516, %v538
        %540 = vdwg.mxu0
        %v541 = vsub.f32 0.0, %v536
        %v542 = vsub.f32 0.0, %v539
        %v543 = vmul.f32 %v541, 1.442695
        %v544 = vpow.pop %v543
        %v545 = vmul.f32 %v542, 1.442695
        %v546 = vpow.pop %v545
        %v547 = vadd.f32 %v544, 1.0
        %v548 = vadd.f32 %v546, 1.0
        %v549 = vrcp.pop %v547
        %v550 = vmul.f32 %v547, %v549
        %v551 = vsub.f32 1.0, %v550
        %v552 = vmul.f32 %v549, %v551
        %v553 = vadd.f32 %v549, %v552
        %vm554 = vweird.f32 %v547
        %vm555 = vweird.f32 %v549
        %vm556 = vmor %vm554, %vm555
        %v557 = vsel %vm556, %v549, %v553
        %v558 = vand.u32 2147483647, %v547
        %vm559 = vcmp.eq.f32.partialorder %v558, 8.507059e+37
        %v560 = vand.u32 %v547, 2147483648
        %v561 = vor.u32 1.1754944e-38, %v560
        %v562 = vsel %vm559, %v561, %v557
        %v563 = vmul.f32 1.0, %v562
        %v564 = vrcp.pop %v548
        %v565 = vmul.f32 %v548, %v564
        %v566 = vsub.f32 1.0, %v565
        %v567 = vmul.f32 %v564, %v566
        %v568 = vadd.f32 %v564, %v567
        %vm569 = vweird.f32 %v548
        %vm570 = vweird.f32 %v564
        %vm571 = vmor %vm569, %vm570
        %v572 = vsel %vm571, %v564, %v568
        %v573 = vand.u32 2147483647, %v548
        %vm574 = vcmp.eq.f32.partialorder %v573, 8.507059e+37
        %v575 = vand.u32 %v548, 2147483648
        %v576 = vor.u32 1.1754944e-38, %v575
        %v577 = vsel %vm574, %v576, %v572
        %v578 = vmul.f32 1.0, %v577
        %579 = vst [vmem:[%s318] sm:$0xff] %v563
        %580 = vst [vmem:[%s318 + $0x8] sm:$0xff] %v578
        %s581 = sand.u32 %s183, 1
        %s582 = scalar_lea.sflag [#allocation4], %s581
        %s583 = sand.u32 %s183, 1
        %s584 = smul.addr %s583, 16
        %s585 = scalar_lea.vmem [#allocation7], %s584
        // Predicated region
        $region57: #{tpu_custom_call.1} parent=47 // pred_check
          %p586 = pneg %p193
        $region58: #{tpu_custom_call.1} parent=47 // pred_check_branch
          %588 = sbr.rel (%p586) target = $region60
        $region59: #{tpu_custom_call.1} parent=47 // pred_region
          %s589 = smul.u32 2, %s23
          %s590 = ssub.s32 7, %s589
          %p591 = scmp.lt.s32.totalorder %s590, 2
          %s592 = scalar_select %p591, %s590, 2
          %s593 = smul.u32 8, %s592
          %s594 = ssub.s32 16, %s593
          %s595 = sshll.u32 %s594, 4
          %596 = vsyncadd %s582, %s595
          %p597 = scmp.ne.s32.totalorder 0, %s593
          %s598 = smul.addr %s589, 8
          %s599 = scalar_lea.hbm %s7, %s598
          %s600 = smul.u32 8, %s592
          %s601 = sshll.u32 %s585, 4
          %s602 = int_to_ptr.vmem [resolvable:$true] %s601
          %s603 = sshll.u32 %s599, 4
          %s604 = int_to_ptr.hbm [resolvable:$true] %s603
          %s605 = sshll.u32 %s600, 4
          %609 = dma.vmem_to_hbm [thread:$0]  (%p597), %s602, %s605, %s604, %s582, 128, 128, 8
        $region60: #{tpu_custom_call.1} parent=47 // pred_fallthru
          _
      $region48: #{tpu_custom_call.1} parent=5 // pred_fallthru
        _
      %p610 = scmp.le.s32.totalorder 2, %s18
      // Predicated region
      $region61: #{tpu_custom_call.1} parent=5 // pred_check
        %p611 = pneg %p610
      $region62: #{tpu_custom_call.1} parent=5 // pred_check_branch
        %613 = sbr.rel (%p611) target = $region64
      $region63: #{tpu_custom_call.1} parent=5 // pred_region
        %s614 = ssub.s32 %s18, 2
        // Predicated region
        $region65: #{tpu_custom_call.1} parent=63 // pred_check
          %p615 = pneg %p199
        $region66: #{tpu_custom_call.1} parent=63 // pred_check_branch
          %617 = sbr.rel (%p615) target = $region68
        $region67: #{tpu_custom_call.1} parent=63 // pred_region
          %s618 = sand.u32 %s184, 1
          %s619 = scalar_lea.sflag [#allocation4], %s618
          %s620 = sand.u32 %s184, 1
          %s621 = smul.addr %s620, 16
          %s622 = scalar_lea.vmem [#allocation7], %s621
          %624 = dma.done %s619, 256
        $region68: #{tpu_custom_call.1} parent=63 // pred_fallthru
          _
      $region64: #{tpu_custom_call.1} parent=5 // pred_fallthru
        _
    $region6: #{tpu_custom_call.1} parent=1 // loop_footer
      %s22 = sadd.s32 1, %s18
    $region7: #{tpu_custom_call.1} parent=1 // loop_footer_branch
      %17 = sbr.rel target = $region3
    $region8: #{tpu_custom_call.1} parent=1 // loop_exit
      _
    %625 = vsyncpa [#allocation3], 1
    %s626 = scalar_lea.sflag [#allocation3], 1
    %627 = vsyncpa %s626, 1
    %628 = vsyncpa [#allocation6], 1
    %629 = vsyncpa [#allocation4], 1
    %s630 = scalar_lea.sflag [#allocation4], 1
    %631 = vsyncpa %s630, 1

</llo_original>
